<compile_context>
chip_gen: v7x
topology: tpu7x:2x2x1
jax: 0.10.0
libtpu: 0.0.40
codegen_flags: <defaults>
</compile_context>

<pallas_src>
import functools

import jax
import jax.numpy as jnp
import numpy as np
from jax import lax
from jax.experimental import pallas as pl
from jax.experimental.pallas import tpu as pltpu

TOLERANCE = 1e-3


def _round_up(v, m):
    return ((v + m - 1) // m) * m


def _multishield_kernel(x_ref, w_ref, b_ref, lab_ref, out_ref, acc_ref,
                        *, num_classes, tolerance):
    d = pl.program_id(1)

    @pl.when(d == 0)
    def _():
        acc_ref[...] = jnp.zeros_like(acc_ref)

    # Fused matmul: one MXU pass accumulates x-tile @ [W_dnn | W_clip | 0]-tile.
    acc_ref[...] += jnp.dot(x_ref[...], w_ref[...],
                            preferred_element_type=jnp.float32)

    @pl.when(d == pl.num_programs(1) - 1)
    def _():
        fused = acc_ref[...] + b_ref[...]                     # (TB, KEp) f32
        tb, kep = fused.shape
        kout = out_ref.shape[1]                               # multiple of 128

        col = lax.broadcasted_iota(jnp.int32, (tb, kep), 1)

        # dnn logits live in columns [0, K): max / first-occurrence argmax via
        # iota masks on the padded accumulator (no unaligned lane slice).
        logits_m = jnp.where(col < num_classes, fused, -jnp.inf)
        max_logit = jnp.max(logits_m, axis=1, keepdims=True)  # (TB, 1)
        idx = jnp.min(jnp.where(logits_m == max_logit, col, kep),
                      axis=1, keepdims=True)                  # (TB, 1) int32

        # Image-embedding squared norm via masked reduction over cols >= K
        # (padded columns beyond K+E are exactly zero -> contribute nothing).
        ss = jnp.sum(jnp.where(col >= num_classes, fused * fused, 0.0),
                     axis=-1, keepdims=True)                  # (TB, 1)
        inv = lax.rsqrt(ss + 1e-12)

        # Cosine similarity: lab_ref is the pre-normalized, pre-transposed
        # label table with zero rows for the logits / padding columns, so the
        # non-embedding columns of `fused * inv` contribute exactly zero.
        cos = jnp.dot(fused * inv, lab_ref[...],
                      preferred_element_type=jnp.float32)     # (TB, K)

        iota_k = lax.broadcasted_iota(jnp.int32, (tb, num_classes), 1)
        cos_i = jnp.sum(jnp.where(iota_k == idx, cos, 0.0),
                        axis=1, keepdims=True)                # (TB, 1)
        cos_max = jnp.max(cos, axis=1, keepdims=True)         # (TB, 1)
        rej = max_logit + jnp.abs(cos_max - cos_i) - tolerance

        # Lane-dense output: [logits | rejection | zeros].
        base = fused[:, :kout]                                # aligned slice
        col_o = lax.broadcasted_iota(jnp.int32, (tb, kout), 1)
        out = jnp.where(col_o < num_classes, base, 0.0)
        out_ref[...] = jnp.where(col_o == num_classes, rej, out)


def multishield_forward(x_nchw, w_dnn, b_dnn, w_clip, b_clip, label_emb,
                        tolerance=TOLERANCE, compute_dtype=jnp.bfloat16,
                        d_tile=512, b_tile=128):
    B = x_nchw.shape[0]
    D = int(np.prod(x_nchw.shape[1:]))
    K = w_dnn.shape[1]
    E = w_clip.shape[1]
    KE = K + E
    KEp = _round_up(KE, 128)          # lane-dense fused width
    Kout = _round_up(K + 1, 128)      # lane-dense output width
    assert KEp >= Kout                # holds since E >= 1

    x = x_nchw.reshape(B, D)          # NCHW row-major flatten

    # ---- x-independent prep in the wrapper --------------------------------
    w_fused = jnp.concatenate([w_dnn, w_clip], axis=1)          # (D, K+E)
    b_fused = jnp.concatenate([b_dnn, b_clip], axis=1).astype(jnp.float32)
    if KEp != KE:
        w_fused = jnp.pad(w_fused, ((0, 0), (0, KEp - KE)))
        b_fused = jnp.pad(b_fused, ((0, 0), (0, KEp - KE)))
    lab_n = label_emb / jnp.sqrt(
        jnp.sum(label_emb * label_emb, axis=-1, keepdims=True) + 1e-12)
    lab_padT = jnp.zeros((KEp, K), jnp.float32).at[K:KE, :].set(
        lab_n.T.astype(jnp.float32))                            # (KEp, K)

    # ---- D tiling (reduction axis, zero-padded so partial sums are exact) --
    d_round = _round_up(D, 128)
    td = min(d_tile, d_round)                                   # multiple of 128
    Dp = _round_up(D, td)
    if Dp != D:
        x = jnp.pad(x, ((0, 0), (0, Dp - D)))
        w_fused = jnp.pad(w_fused, ((0, Dp - D), (0, 0)))
    nd = Dp // td

    # ---- batch tiling -------------------------------------------------------
    if B <= b_tile:
        tb, Bp = B, B
    else:
        tb = b_tile
        Bp = _round_up(B, tb)
        if Bp != B:
            x = jnp.pad(x, ((0, Bp - B), (0, 0)))
    nb = Bp // tb

    # Cast only the large streamed operands; epilogue stays f32.
    x_c = x.astype(compute_dtype)
    w_c = w_fused.astype(compute_dtype)

    kernel = functools.partial(_multishield_kernel,
                               num_classes=K, tolerance=tolerance)

    flops = 2 * Bp * Dp * KEp + 2 * Bp * KEp * K
    bytes_accessed = (x_c.size * x_c.dtype.itemsize
                      + w_c.size * w_c.dtype.itemsize
                      + b_fused.size * 4 + lab_padT.size * 4
                      + Bp * Kout * 4)

    out = pl.pallas_call(
        kernel,
        out_shape=jax.ShapeDtypeStruct((Bp, Kout), jnp.float32),
        grid_spec=pltpu.PrefetchScalarGridSpec(
            num_scalar_prefetch=0,
            grid=(nb, nd),
            in_specs=[
                pl.BlockSpec((tb, td), lambda bi, di: (bi, di)),   # x
                pl.BlockSpec((td, KEp), lambda bi, di: (di, 0)),   # [W_dnn|W_clip|0]
                pl.BlockSpec((1, KEp), lambda bi, di: (0, 0)),     # fused bias
                pl.BlockSpec((KEp, K), lambda bi, di: (0, 0)),     # padded lab_n^T
            ],
            out_specs=pl.BlockSpec((tb, Kout), lambda bi, di: (bi, 0)),
            scratch_shapes=[pltpu.VMEM((tb, KEp), jnp.float32)],
        ),
        compiler_params=pltpu.CompilerParams(
            dimension_semantics=("parallel", "arbitrary"),
            vmem_limit_bytes=32 * 1024 * 1024,
        ),
        cost_estimate=pl.CostEstimate(flops=flops,
                                      transcendentals=Bp,
                                      bytes_accessed=bytes_accessed),
    )(x_c, w_c, b_fused, lab_padT)

    return out[:B, :K + 1]                                       # (B, K+1)


def _reference(x_nchw, w_dnn, b_dnn, w_clip, b_clip, label_emb,
               tolerance=TOLERANCE, compute_dtype=jnp.bfloat16):
    # Pure-JAX reference mirroring the PyTorch forward (same bf16 operand cast
    # with f32 accumulation as the kernel).
    B = x_nchw.shape[0]
    x = x_nchw.reshape(B, -1).astype(compute_dtype)
    logits = jnp.dot(x, w_dnn.astype(compute_dtype),
                     preferred_element_type=jnp.float32) + b_dnn[0]
    labels = jnp.argmax(logits, axis=-1)
    img = jnp.dot(x, w_clip.astype(compute_dtype),
                  preferred_element_type=jnp.float32) + b_clip[0]
    img_n = img / jnp.sqrt(jnp.sum(img * img, -1, keepdims=True) + 1e-12)
    lab_n = label_emb / jnp.sqrt(
        jnp.sum(label_emb * label_emb, -1, keepdims=True) + 1e-12)
    cos = img_n @ lab_n.T
    cos_max = jnp.max(cos, axis=1)
    cos_i = cos[jnp.arange(B), labels]
    rej = jnp.max(logits, axis=1) + jnp.abs(cos_max - cos_i) - tolerance
    return jnp.concatenate([logits, rej[:, None]], axis=1)


if __name__ == "__main__":
    # small, deterministic shapes: batch=2, channels=4, spatial=16x16,
    # num_classes=10, clip embedding dim=32  (D = 1024 -> 2 reduction tiles)
    B, C, H, W = 2, 4, 16, 16
    K, E = 10, 32
    D = C * H * W

    key = jax.random.PRNGKey(0)
    kx, k1, k2, k3, k4, k5 = jax.random.split(key, 6)

    x = jax.random.normal(kx, (B, C, H, W), dtype=jnp.float32)
    w_dnn = jax.random.normal(k1, (D, K), dtype=jnp.float32) * 0.02
    b_dnn = jax.random.normal(k2, (1, K), dtype=jnp.float32) * 0.02
    w_clip = jax.random.normal(k3, (D, E), dtype=jnp.float32) * 0.02
    b_clip = jax.random.normal(k4, (1, E), dtype=jnp.float32) * 0.02
    label_emb = jax.random.normal(k5, (K, E), dtype=jnp.float32)

    out = multishield_forward(x, w_dnn, b_dnn, w_clip, b_clip, label_emb)
    out = jax.block_until_ready(out)

    ref = _reference(x, w_dnn, b_dnn, w_clip, b_clip, label_emb)
    np.testing.assert_allclose(np.asarray(out), np.asarray(ref),
                               rtol=5e-3, atol=5e-3)
    assert out.shape == (B, K + 1)

    print("KERNEL_OK")
</pallas_src>

<mosaic_0001>
module attributes {stable_mosaic.version = 11 : i64} {
  func.func @_multishield_kernel(%arg0: i32, %arg1: i32, %arg2: memref<2x512xbf16, #tpu.memory_space<vmem>>, %arg3: memref<512x128xbf16, #tpu.memory_space<vmem>>, %arg4: memref<1x128xf32, #tpu.memory_space<vmem>>, %arg5: memref<128x10xf32, #tpu.memory_space<vmem>>, %arg6: memref<2x128xf32, #tpu.memory_space<vmem>>, %arg7: memref<2x128xf32, #tpu.memory_space<vmem>>) attributes {dimension_semantics = [#tpu.dimension_semantics<parallel>, #tpu.dimension_semantics<arbitrary>], iteration_bounds = array<i64: 1, 2>, scalar_prefetch = 0 : i64, scratch_operands = 1 : i64, tpu.core_type = #tpu.core_type<tc>, window_params = [{transform_indices = @transform_0, window_bounds = array<i64: 2, 512>}, {transform_indices = @transform_1, window_bounds = array<i64: 512, 128>}, {pipeline_mode = #tpu.pipeline_mode<synchronous>, transform_indices = @transform_2, window_bounds = array<i64: 1, 128>}, {pipeline_mode = #tpu.pipeline_mode<synchronous>, transform_indices = @transform_3, window_bounds = array<i64: 128, 10>}, {transform_indices = @transform_4, window_bounds = array<i64: 2, 128>}]} {
    %c0_i32 = arith.constant 0 : i32
    %0 = arith.cmpi eq, %arg1, %c0_i32 : i32
    %1 = arith.extui %0 : i1 to i32
    %c0_i32_0 = arith.constant 0 : i32
    %2 = arith.cmpi ne, %1, %c0_i32_0 : i32
    scf.if %2 {
      %cst_9 = arith.constant 0.000000e+00 : f32
      %12 = vector.broadcast %cst_9 : f32 to vector<2x128xf32>
      %c0_10 = arith.constant 0 : index
      %c0_11 = arith.constant 0 : index
      %13 = vector.load %arg7[%c0_10, %c0_11] : memref<2x128xf32, #tpu.memory_space<vmem>>, vector<2x128xf32>
      tpu.vector_store %arg7[%c0_10, %c0_11], %12 {strides = array<i32>} : memref<2x128xf32, #tpu.memory_space<vmem>>, vector<2x128xf32>,
    } else {
    }
    %c0 = arith.constant 0 : index
    %c0_1 = arith.constant 0 : index
    %3 = vector.load %arg7[%c0, %c0_1] : memref<2x128xf32, #tpu.memory_space<vmem>>, vector<2x128xf32>
    %c0_2 = arith.constant 0 : index
    %c0_3 = arith.constant 0 : index
    %4 = vector.load %arg2[%c0_2, %c0_3] : memref<2x512xbf16, #tpu.memory_space<vmem>>, vector<2x512xbf16>
    %c0_4 = arith.constant 0 : index
    %c0_5 = arith.constant 0 : index
    %5 = vector.load %arg3[%c0_4, %c0_5] : memref<512x128xbf16, #tpu.memory_space<vmem>>, vector<512x128xbf16>
    %cst = arith.constant dense<0.000000e+00> : vector<2x128xf32>
    %6 = tpu.matmul %4, %5, %cst {dimension_numbers = #tpu.dot_dimension_numbers<[1], [0], [0], [1], [0, 0, 1, 1], [], []>} : vector<2x512xbf16>, vector<512x128xbf16>, vector<2x128xf32> -> vector<2x128xf32>
    %7 = arith.addf %3, %6 : vector<2x128xf32>
    %c0_6 = arith.constant 0 : index
    %c0_7 = arith.constant 0 : index
    %8 = vector.load %arg7[%c0_6, %c0_7] : memref<2x128xf32, #tpu.memory_space<vmem>>, vector<2x128xf32>
    tpu.vector_store %arg7[%c0_6, %c0_7], %7 {strides = array<i32>} : memref<2x128xf32, #tpu.memory_space<vmem>>, vector<2x128xf32>,
    %c1_i32 = arith.constant 1 : i32
    %9 = arith.cmpi eq, %arg1, %c1_i32 : i32
    %10 = arith.extui %9 : i1 to i32
    %c0_i32_8 = arith.constant 0 : i32
    %11 = arith.cmpi ne, %10, %c0_i32_8 : i32
    scf.if %11 {
      %c0_9 = arith.constant 0 : index
      %c0_10 = arith.constant 0 : index
      %12 = vector.load %arg7[%c0_9, %c0_10] : memref<2x128xf32, #tpu.memory_space<vmem>>, vector<2x128xf32>
      %c0_11 = arith.constant 0 : index
      %c0_12 = arith.constant 0 : index
      %13 = vector.load %arg4[%c0_11, %c0_12] : memref<1x128xf32, #tpu.memory_space<vmem>>, vector<1x128xf32>
      %14 = vector.broadcast %13 : vector<1x128xf32> to vector<2x128xf32>
      %15 = arith.addf %12, %14 : vector<2x128xf32>
      %16 = tpu.iota {dimensions = array<i32: 1>} : vector<2x128xi32>
      %c10_i32 = arith.constant 10 : i32
      %17 = vector.broadcast %c10_i32 : i32 to vector<2x128xi32>
      %18 = arith.cmpi slt, %16, %17 : vector<2x128xi32>
      %cst_13 = arith.constant 0xFF800000 : f32
      %19 = vector.broadcast %cst_13 : f32 to vector<2x128xf32>
      %20 = arith.select %18, %15, %19 : vector<2x128xi1>, vector<2x128xf32>
      %cst_14 = arith.constant dense<0xFF800000> : vector<2xf32>
      %21 = vector.multi_reduction <maximumf>, %20, %cst_14 [1] : vector<2x128xf32> to vector<2xf32>
      %22 = vector.shape_cast %21 : vector<2xf32> to vector<2x1xf32>
      %23 = vector.broadcast %22 : vector<2x1xf32> to vector<2x128xf32>
      %24 = arith.cmpf oeq, %20, %23 : vector<2x128xf32>
      %c128_i32 = arith.constant 128 : i32
      %25 = vector.broadcast %c128_i32 : i32 to vector<2x128xi32>
      %26 = arith.select %24, %16, %25 : vector<2x128xi1>, vector<2x128xi32>
      %cst_15 = arith.constant dense<2147483647> : vector<2xi32>
      %27 = vector.multi_reduction <minsi>, %26, %cst_15 [1] : vector<2x128xi32> to vector<2xi32>
      %28 = vector.shape_cast %27 : vector<2xi32> to vector<2x1xi32>
      %c10_i32_16 = arith.constant 10 : i32
      %29 = vector.broadcast %c10_i32_16 : i32 to vector<2x128xi32>
      %30 = arith.cmpi sge, %16, %29 : vector<2x128xi32>
      %31 = arith.mulf %15, %15 : vector<2x128xf32>
      %cst_17 = arith.constant 0.000000e+00 : f32
      %32 = vector.broadcast %cst_17 : f32 to vector<2x128xf32>
      %33 = arith.select %30, %31, %32 : vector<2x128xi1>, vector<2x128xf32>
      %cst_18 = arith.constant dense<0.000000e+00> : vector<2xf32>
      %34 = vector.multi_reduction <add>, %33, %cst_18 [1] : vector<2x128xf32> to vector<2xf32>
      %35 = vector.shape_cast %34 : vector<2xf32> to vector<2x1xf32>
      %cst_19 = arith.constant 9.99999996E-13 : f32
      %36 = vector.broadcast %cst_19 : f32 to vector<2x1xf32>
      %37 = arith.addf %35, %36 : vector<2x1xf32>
      %38 = math.rsqrt %37 : vector<2x1xf32>
      %39 = vector.broadcast %38 : vector<2x1xf32> to vector<2x128xf32>
      %40 = arith.mulf %15, %39 : vector<2x128xf32>
      %c0_20 = arith.constant 0 : index
      %c0_21 = arith.constant 0 : index
      %41 = vector.load %arg5[%c0_20, %c0_21] : memref<128x10xf32, #tpu.memory_space<vmem>>, vector<128x10xf32>
      %cst_22 = arith.constant dense<0.000000e+00> : vector<2x10xf32>
      %42 = tpu.matmul %40, %41, %cst_22 {dimension_numbers = #tpu.dot_dimension_numbers<[1], [0], [0], [1], [0, 0, 1, 1], [], []>} : vector<2x128xf32>, vector<128x10xf32>, vector<2x10xf32> -> vector<2x10xf32>
      %43 = tpu.iota {dimensions = array<i32: 1>} : vector<2x10xi32>
      %44 = vector.broadcast %28 : vector<2x1xi32> to vector<2x10xi32>
      %45 = arith.cmpi eq, %43, %44 : vector<2x10xi32>
      %cst_23 = arith.constant 0.000000e+00 : f32
      %46 = vector.broadcast %cst_23 : f32 to vector<2x10xf32>
      %47 = arith.select %45, %42, %46 : vector<2x10xi1>, vector<2x10xf32>
      %cst_24 = arith.constant dense<0.000000e+00> : vector<2xf32>
      %48 = vector.multi_reduction <add>, %47, %cst_24 [1] : vector<2x10xf32> to vector<2xf32>
      %49 = vector.shape_cast %48 : vector<2xf32> to vector<2x1xf32>
      %cst_25 = arith.constant dense<0xFF800000> : vector<2xf32>
      %50 = vector.multi_reduction <maximumf>, %42, %cst_25 [1] : vector<2x10xf32> to vector<2xf32>
      %51 = vector.shape_cast %50 : vector<2xf32> to vector<2x1xf32>
      %52 = arith.subf %51, %49 : vector<2x1xf32>
      %53 = math.absf %52 : vector<2x1xf32>
      %54 = arith.addf %22, %53 : vector<2x1xf32>
      %cst_26 = arith.constant 1.000000e-03 : f32
      %55 = vector.broadcast %cst_26 : f32 to vector<2x1xf32>
      %56 = arith.subf %54, %55 : vector<2x1xf32>
      %57 = tpu.iota {dimensions = array<i32: 1>} : vector<2x128xi32>
      %c10_i32_27 = arith.constant 10 : i32
      %58 = vector.broadcast %c10_i32_27 : i32 to vector<2x128xi32>
      %59 = arith.cmpi slt, %57, %58 : vector<2x128xi32>
      %cst_28 = arith.constant 0.000000e+00 : f32
      %60 = vector.broadcast %cst_28 : f32 to vector<2x128xf32>
      %61 = arith.select %59, %15, %60 : vector<2x128xi1>, vector<2x128xf32>
      %c10_i32_29 = arith.constant 10 : i32
      %62 = vector.broadcast %c10_i32_29 : i32 to vector<2x128xi32>
      %63 = arith.cmpi eq, %57, %62 : vector<2x128xi32>
      %64 = vector.shape_cast %56 : vector<2x1xf32> to vector<2x1xf32>
      %65 = vector.broadcast %64 : vector<2x1xf32> to vector<2x128xf32>
      %66 = arith.select %63, %65, %61 : vector<2x128xi1>, vector<2x128xf32>
      %c0_30 = arith.constant 0 : index
      %c0_31 = arith.constant 0 : index
      %67 = vector.load %arg6[%c0_30, %c0_31] : memref<2x128xf32, #tpu.memory_space<vmem>>, vector<2x128xf32>
      tpu.vector_store %arg6[%c0_30, %c0_31], %66 {strides = array<i32>} : memref<2x128xf32, #tpu.memory_space<vmem>>, vector<2x128xf32>,
    } else {
    }
    return
  }
  func.func @transform_0(%arg0: i32, %arg1: i32) -> (i32, i32) {
    %c0_i32 = arith.constant 0 : i32
    return %arg0, %arg1 : i32, i32
  }
  func.func @transform_1(%arg0: i32, %arg1: i32) -> (i32, i32) {
    %c0_i32 = arith.constant 0 : i32
    %c0_i32_0 = arith.constant 0 : i32
    return %arg1, %c0_i32 : i32, i32
  }
  func.func @transform_2(%arg0: i32, %arg1: i32) -> (i32, i32) {
    %c0_i32 = arith.constant 0 : i32
    %c0_i32_0 = arith.constant 0 : i32
    %c0_i32_1 = arith.constant 0 : i32
    return %c0_i32, %c0_i32_0 : i32, i32
  }
  func.func @transform_3(%arg0: i32, %arg1: i32) -> (i32, i32) {
    %c0_i32 = arith.constant 0 : i32
    %c0_i32_0 = arith.constant 0 : i32
    %c0_i32_1 = arith.constant 0 : i32
    return %c0_i32, %c0_i32_0 : i32, i32
  }
  func.func @transform_4(%arg0: i32, %arg1: i32) -> (i32, i32) {
    %c0_i32 = arith.constant 0 : i32
    %c0_i32_0 = arith.constant 0 : i32
    return %arg0, %c0_i32 : i32, i32
  }
}

</mosaic_0001>

<llo_original>
// kernel: tpu_custom_call.1
$region0: #{tpu_custom_call.1}
  #allocation0 [shape = 'u32[]', space=smem, size = 0x4, offset = 0x4, fixed_abs, tag = 'smem constant byte address 0x4 - core index']
  #allocation1 [shape = 'u32[144,128]{1,0:T(1,128)}', space=vmem, size = 0x12000, scoped, tag = 'internal scratch']
  #allocation2 [shape = 'f32[2,128]{1,0:T(2,128)}', space=vmem, size = 0x400, scoped, tag = 'scratch operand']
  %s0 = inlined_call_operand.vmem [shape: bf16[2,1024], index: 0, kind: input, shape index: {}]
  %s1 = inlined_call_operand.hbm [shape: bf16[1024,128], index: 1, kind: input, shape index: {}]
  %s2 = inlined_call_operand.vmem [shape: f32[1,128], index: 2, kind: input, shape index: {}]
  %s3 = inlined_call_operand.vmem [shape: f32[128,10], index: 3, kind: input, shape index: {}]
  %s4 = inlined_call_operand.hbm [shape: f32[2,128], index: 4, kind: output, shape index: {}]
  %s5 = sld [smem:[#allocation0]]
  $region61: #{tpu_custom_call.1} parent=0
    _
  %s7 = ssub.s32 1, %s5
  %s8 = scalar_select 0, %s7, %s5
  $region1: #{tpu_custom_call.1} parent=0
    #allocation3 [shape = 'u8[262144]{0}', space=vmem, size = 0x40000, scoped, tag = 'input window, operand 1']
    #allocation4 [shape = 's32[2]{0}', space=sflag, size = 0x8, scoped, tag = 'scoped memory for tpu_custom_call.1']
    #allocation5 [shape = 's32[2]{0}', space=sflag, size = 0x8, scoped, tag = 'scoped memory for tpu_custom_call.1']
    #allocation6 [shape = 'u8[1024]{0}', space=vmem, size = 0x400, scoped, tag = 'output window, operand 0, single buffered']
    %9 = vsyncpa [#allocation4], 0
    %s10 = scalar_lea.sflag [#allocation4], 1
    %11 = vsyncpa %s10, 0
    %12 = vsyncpa [#allocation5], 0
    loop: start=0, step=1, limit=4
    $region2: #{tpu_custom_call.1} parent=1 // loop_pre_header
      _
    $region3: #{tpu_custom_call.1} parent=1 // loop_header
      %s14 = sphi 0, %s18
      %p15 = scmp.ge.s32.totalorder %s14, 4
      %s21 = sphi 0, %s33
      %s22 = sphi 0, %s29
      %s23 = sphi 0, %s21
      %s24 = sphi 0, %s22
      %s25 = sphi 0, %s23
      %s26 = sphi 0, %s24
      %s38 = sphi 0, %s40
      %s41 = sphi 0, %s38
      %s42 = sphi 0, %s41
      %s58 = sphi 0, %s42
      %s64 = sphi 0, %s66
      %s67 = sphi 0, %s64
      %s68 = sphi 0, %s67
      %s84 = sphi 0, %s68
      %s88 = sphi 0, %s88
      %s90 = sphi 0, %s88
      %s91 = sphi 0, %s90
      %s105 = sphi 0, %s91
      %s109 = sphi 0, %s109
      %s111 = sphi 0, %s109
      %s112 = sphi 0, %s111
      %s126 = sphi 0, %s112
      %s132 = sphi 0, %s134
      %s135 = sphi 0, %s132
      %s136 = sphi 0, %s135
      %s152 = sphi 0, %s136
    $region4: #{tpu_custom_call.1} parent=1 // loop_header_branch
      %17 = sbr.rel (%p15) target = $region8
    $region5: #{tpu_custom_call.1} parent=1 // loop_body
      %s19 = ssub.s32 %s14, 1
      %s20 = ssub.s32 %s14, 2
      %s27 = sadd.s32 1, %s22
      %p28 = scmp.ge.s32.totalorder %s27, 2
      %s29 = scalar_select %p28, 0, %s27
      %s30 = sadd.s32 1, %s21
      %s31 = scalar_select %p28, %s30, %s21
      %p32 = scmp.ge.s32.totalorder %s31, 1
      %s33 = scalar_select %p32, 0, %s31
      %s34 = ssub.s32 %s21, %s33
      %s35 = ssub.s32 %s22, %s29
      %s36 = sor.u32 %s34, %s35
      %p37 = scmp.eq.s32.totalorder %s36, 0
      %s39 = sadd.s32 %s38, 1
      %s40 = scalar_select %p37, %s38, %s39
      %p43 = pneg %p37
      %p44 = scmp.eq.s32.totalorder %s14, 1
      %p45 = por %p43, %p44
      %p46 = scmp.ne.s32.totalorder %s38, %s41
      %p47 = scmp.eq.s32.totalorder %s14, 0
      %p48 = por %p46, %p47
      %p49 = scmp.ne.s32.totalorder %s38, %s41
      %p50 = scmp.eq.s32.totalorder %s19, 1
      %p51 = por %p49, %p50
      %p52 = scmp.ne.s32.totalorder %s41, %s42
      %p53 = scmp.eq.s32.totalorder %s19, 0
      %p54 = por %p52, %p53
      %p55 = scmp.ne.s32.totalorder %s41, %s42
      %p56 = scmp.eq.s32.totalorder %s20, 1
      %p57 = por %p55, %p56
      %p59 = scmp.ne.s32.totalorder %s42, %s58
      %p60 = scmp.eq.s32.totalorder %s20, 0
      %p61 = por %p59, %p60
      %s62 = ssub.s32 %s22, %s29
      %p63 = scmp.eq.s32.totalorder %s62, 0
      %s65 = sadd.s32 %s64, 1
      %s66 = scalar_select %p63, %s64, %s65
      %p69 = pneg %p63
      %p70 = scmp.eq.s32.totalorder %s14, 1
      %p71 = por %p69, %p70
      %p72 = scmp.ne.s32.totalorder %s64, %s67
      %p73 = scmp.eq.s32.totalorder %s14, 0
      %p74 = por %p72, %p73
      %p75 = scmp.ne.s32.totalorder %s64, %s67
      %p76 = scmp.eq.s32.totalorder %s19, 1
      %p77 = por %p75, %p76
      %p78 = scmp.ne.s32.totalorder %s67, %s68
      %p79 = scmp.eq.s32.totalorder %s19, 0
      %p80 = por %p78, %p79
      %p81 = scmp.ne.s32.totalorder %s67, %s68
      %p82 = scmp.eq.s32.totalorder %s20, 1
      %p83 = por %p81, %p82
      %p85 = scmp.ne.s32.totalorder %s68, %s84
      %p86 = scmp.eq.s32.totalorder %s20, 0
      %p87 = por %p85, %p86
      %s89 = sadd.s32 %s88, 1
      %p92 = scmp.eq.s32.totalorder %s14, 1
      %p93 = scmp.ne.s32.totalorder %s88, %s90
      %p94 = scmp.eq.s32.totalorder %s14, 0
      %p95 = por %p93, %p94
      %p96 = scmp.ne.s32.totalorder %s88, %s90
      %p97 = scmp.eq.s32.totalorder %s19, 1
      %p98 = por %p96, %p97
      %p99 = scmp.ne.s32.totalorder %s90, %s91
      %p100 = scmp.eq.s32.totalorder %s19, 0
      %p101 = por %p99, %p100
      %p102 = scmp.ne.s32.totalorder %s90, %s91
      %p103 = scmp.eq.s32.totalorder %s20, 1
      %p104 = por %p102, %p103
      %p106 = scmp.ne.s32.totalorder %s91, %s105
      %p107 = scmp.eq.s32.totalorder %s20, 0
      %p108 = por %p106, %p107
      %s110 = sadd.s32 %s109, 1
      %p113 = scmp.eq.s32.totalorder %s14, 1
      %p114 = scmp.ne.s32.totalorder %s109, %s111
      %p115 = scmp.eq.s32.totalorder %s14, 0
      %p116 = por %p114, %p115
      %p117 = scmp.ne.s32.totalorder %s109, %s111
      %p118 = scmp.eq.s32.totalorder %s19, 1
      %p119 = por %p117, %p118
      %p120 = scmp.ne.s32.totalorder %s111, %s112
      %p121 = scmp.eq.s32.totalorder %s19, 0
      %p122 = por %p120, %p121
      %p123 = scmp.ne.s32.totalorder %s111, %s112
      %p124 = scmp.eq.s32.totalorder %s20, 1
      %p125 = por %p123, %p124
      %p127 = scmp.ne.s32.totalorder %s112, %s126
      %p128 = scmp.eq.s32.totalorder %s20, 0
      %p129 = por %p127, %p128
      %s130 = ssub.s32 %s21, %s33
      %p131 = scmp.eq.s32.totalorder %s130, 0
      %s133 = sadd.s32 %s132, 1
      %s134 = scalar_select %p131, %s132, %s133
      %p137 = pneg %p131
      %p138 = scmp.eq.s32.totalorder %s14, 1
      %p139 = por %p137, %p138
      %p140 = scmp.ne.s32.totalorder %s132, %s135
      %p141 = scmp.eq.s32.totalorder %s14, 0
      %p142 = por %p140, %p141
      %p143 = scmp.ne.s32.totalorder %s132, %s135
      %p144 = scmp.eq.s32.totalorder %s19, 1
      %p145 = por %p143, %p144
      %p146 = scmp.ne.s32.totalorder %s135, %s136
      %p147 = scmp.eq.s32.totalorder %s19, 0
      %p148 = por %p146, %p147
      %p149 = scmp.ne.s32.totalorder %s135, %s136
      %p150 = scmp.eq.s32.totalorder %s20, 1
      %p151 = por %p149, %p150
      %p153 = scmp.ne.s32.totalorder %s136, %s152
      %p154 = scmp.eq.s32.totalorder %s20, 0
      %p155 = por %p153, %p154
      %p156 = scmp.le.s32.totalorder 1, %s14
      %p157 = scmp.lt.s32.totalorder %s14, 3
      %p158 = pnand %p156, %p157
      %p159 = pneg %p158
      // Predicated region
      $region9: #{tpu_custom_call.1} parent=5 // pred_check
        _
      $region10: #{tpu_custom_call.1} parent=5 // pred_check_branch
        %161 = sbr.rel (%p158) target = $region12
      $region11: #{tpu_custom_call.1} parent=5 // pred_region
        %s162 = ssub.s32 %s14, 1
        // Predicated region
        $region13: #{tpu_custom_call.1} parent=11 // pred_check
          %p163 = pneg %p101
        $region14: #{tpu_custom_call.1} parent=11 // pred_check_branch
          %165 = sbr.rel (%p163) target = $region16
        $region15: #{tpu_custom_call.1} parent=11 // pred_region
          _
        $region16: #{tpu_custom_call.1} parent=11 // pred_fallthru
          _
        // Predicated region
        $region17: #{tpu_custom_call.1} parent=11 // pred_check
          %p166 = pneg %p122
        $region18: #{tpu_custom_call.1} parent=11 // pred_check_branch
          %168 = sbr.rel (%p166) target = $region20
        $region19: #{tpu_custom_call.1} parent=11 // pred_region
          _
        $region20: #{tpu_custom_call.1} parent=11 // pred_fallthru
          _
      $region12: #{tpu_custom_call.1} parent=5 // pred_fallthru
        _
      %p169 = scmp.lt.s32.totalorder %s14, 2
      // Predicated region
      $region21: #{tpu_custom_call.1} parent=5 // pred_check
        %p170 = pneg %p169
      $region22: #{tpu_custom_call.1} parent=5 // pred_check_branch
        %172 = sbr.rel (%p170) target = $region24
      $region23: #{tpu_custom_call.1} parent=5 // pred_region
        // Predicated region
        $region25: #{tpu_custom_call.1} parent=23 // pred_check
          %p173 = pneg %p48
        $region26: #{tpu_custom_call.1} parent=23 // pred_check_branch
          %175 = sbr.rel (%p173) target = $region28
        $region27: #{tpu_custom_call.1} parent=23 // pred_region
          %s176 = smul.u32 4, %s22
          %p177 = scmp.lt.s32.totalorder %s21, 0
          %s178 = scalar_select %p177, %s21, 0
          %p179 = scmp.lt.s32.totalorder %s176, 7
          %s180 = scalar_select %p179, %s176, 7
          %s181 = smul.addr %s178, 8
          %s182 = sadd.s32 %s180, %s181
          %s183 = scalar_lea.vmem %s0, %s182
          %s184 = smul.u32 4, %s22
        $region28: #{tpu_custom_call.1} parent=23 // pred_fallthru
          _
        // Predicated region
        $region29: #{tpu_custom_call.1} parent=23 // pred_check
          %p185 = pneg %p74
        $region30: #{tpu_custom_call.1} parent=23 // pred_check_branch
          %187 = sbr.rel (%p185) target = $region32
        $region31: #{tpu_custom_call.1} parent=23 // pred_region
          %s188 = sand.u32 %s64, 1
          %s189 = scalar_lea.sflag [#allocation4], %s188
          %s190 = sand.u32 %s64, 1
          %s191 = smul.addr %s190, 256
          %s192 = scalar_lea.vmem [#allocation3], %s191
          %s193 = smul.u32 64, %s22
          %s195 = ssub.s32 4096, 4096
          %196 = vsyncadd %s189, %s195
          %s197 = smul.addr %s193, 64
          %s198 = scalar_lea.hbm %s1, %s197
          %s199 = sshll.u32 %s192, 4
          %s200 = int_to_ptr.vmem [resolvable:$true] %s199
          %205 = dma.hbm_to_vmem [thread:$0]  %s198, 4096, %s200, %s189, 64, 64, 4
        $region32: #{tpu_custom_call.1} parent=23 // pred_fallthru
          _
      $region24: #{tpu_custom_call.1} parent=5 // pred_fallthru
        _
      %p206 = scmp.le.s32.totalorder 1, %s14
      %p207 = scmp.lt.s32.totalorder %s14, 3
      %p208 = pnand %p206, %p207
      %p209 = pneg %p208
      // Predicated region
      $region33: #{tpu_custom_call.1} parent=5 // pred_check
        _
      $region34: #{tpu_custom_call.1} parent=5 // pred_check_branch
        %211 = sbr.rel (%p208) target = $region36
      $region35: #{tpu_custom_call.1} parent=5 // pred_region
        %s212 = ssub.s32 %s14, 1
        %s213 = sand.u32 %s67, 1
        %s214 = scalar_lea.sflag [#allocation4], %s213
        %s215 = sand.u32 %s67, 1
        %s216 = smul.addr %s215, 256
        %s217 = scalar_lea.vmem [#allocation3], %s216
        // Predicated region
        $region37: #{tpu_custom_call.1} parent=35 // pred_check
          %p218 = pneg %p80
        $region38: #{tpu_custom_call.1} parent=35 // pred_check_branch
          %220 = sbr.rel (%p218) target = $region40
        $region39: #{tpu_custom_call.1} parent=35 // pred_region
          %221 = dma.done %s214, 4096
        $region40: #{tpu_custom_call.1} parent=35 // pred_fallthru
          _
        %s222 = smul.u32 4, %s24
        %p223 = scmp.lt.s32.totalorder %s23, 0
        %s224 = scalar_select %p223, %s23, 0
        %p225 = scmp.lt.s32.totalorder %s222, 7
        %s226 = scalar_select %p225, %s222, 7
        %s227 = smul.addr %s224, 8
        %s228 = sadd.s32 %s226, %s227
        %s229 = scalar_lea.vmem %s0, %s228
        %p230 = pneg %p54
        %p231 = pneg %p51
        %s232 = sand.u32 %s67, 1
        %s233 = scalar_lea.sflag [#allocation4], %s232
        %s234 = sand.u32 %s67, 1
        %s235 = smul.addr %s234, 256
        %s236 = scalar_lea.vmem [#allocation3], %s235
        %p237 = pneg %p80
        %p238 = pneg %p77
        %p239 = pneg %p101
        %p240 = pneg %p98
        %p241 = pneg %p122
        %p242 = pneg %p119
        %p243 = pneg %p148
        %p244 = pneg %p145
        %s245 = smul.u32 4, %s24
        %p246 = scmp.lt.s32.totalorder %s23, 0
        %s247 = scalar_select %p246, %s23, 0
        %p248 = scmp.lt.s32.totalorder %s245, 7
        %s249 = scalar_select %p248, %s245, 7
        %s250 = smul.addr %s247, 8
        %s251 = sadd.s32 %s249, %s250
        %s252 = scalar_lea.vmem %s0, %s251
        %s253 = smul.u32 4, %s24
        %s254 = smul.u32 64, %s24
        %p256 = scmp.eq.s32.totalorder %s24, 0
        // Predicated region
        $region41: #{tpu_custom_call.1} parent=35 // pred_check
          %p257 = pneg %p256
        $region42: #{tpu_custom_call.1} parent=35 // pred_check_branch
          %259 = sbr.rel (%p257) target = $region44
        $region43: #{tpu_custom_call.1} parent=35 // pred_region
          %260 = vst [vmem:[#allocation2] sm:$0x3] 0.0
        $region44: #{tpu_custom_call.1} parent=35 // pred_fallthru
          _
        %v261 = vld [vmem:[#allocation2] sm:$0x3]
        %v262 = vld [vmem:[%s252] sm:$0xf]
        %v263 = vld [vmem:[%s217] sm:$0xf]
        %v264 = vld [vmem:[%s217 + $0x4] sm:$0xf]
        %v265 = vld [vmem:[%s217 + $0x8] sm:$0xf]
        %v266 = vld [vmem:[%s217 + $0xc] sm:$0xf]
        %v267 = vld [vmem:[%s217 + $0x10] sm:$0xf]
        %v268 = vld [vmem:[%s217 + $0x14] sm:$0xf]
        %v269 = vld [vmem:[%s217 + $0x18] sm:$0xf]
        %v270 = vld [vmem:[%s217 + $0x1c] sm:$0xf]
        %v271 = vld [vmem:[%s217 + $0x20] sm:$0xf]
        %v272 = vld [vmem:[%s217 + $0x24] sm:$0xf]
        %v273 = vld [vmem:[%s217 + $0x28] sm:$0xf]
        %v274 = vld [vmem:[%s217 + $0x2c] sm:$0xf]
        %v275 = vld [vmem:[%s217 + $0x30] sm:$0xf]
        %v276 = vld [vmem:[%s217 + $0x34] sm:$0xf]
        %v277 = vld [vmem:[%s217 + $0x38] sm:$0xf]
        %v278 = vld [vmem:[%s217 + $0x3c] sm:$0xf]
        %v279 = vld [vmem:[%s217 + $0x40] sm:$0xf]
        %v280 = vld [vmem:[%s217 + $0x44] sm:$0xf]
        %v281 = vld [vmem:[%s217 + $0x48] sm:$0xf]
        %v282 = vld [vmem:[%s217 + $0x4c] sm:$0xf]
        %v283 = vld [vmem:[%s217 + $0x50] sm:$0xf]
        %v284 = vld [vmem:[%s217 + $0x54] sm:$0xf]
        %v285 = vld [vmem:[%s217 + $0x58] sm:$0xf]
        %v286 = vld [vmem:[%s217 + $0x5c] sm:$0xf]
        %v287 = vld [vmem:[%s217 + $0x60] sm:$0xf]
        %v288 = vld [vmem:[%s217 + $0x64] sm:$0xf]
        %v289 = vld [vmem:[%s217 + $0x68] sm:$0xf]
        %v290 = vld [vmem:[%s217 + $0x6c] sm:$0xf]
        %v291 = vld [vmem:[%s217 + $0x70] sm:$0xf]
        %v292 = vld [vmem:[%s217 + $0x74] sm:$0xf]
        %v293 = vld [vmem:[%s217 + $0x78] sm:$0xf]
        %v294 = vld [vmem:[%s217 + $0x7c] sm:$0xf]
        %v295 = vld [vmem:[%s217 + $0x80] sm:$0xf]
        %v296 = vld [vmem:[%s217 + $0x84] sm:$0xf]
        %v297 = vld [vmem:[%s217 + $0x88] sm:$0xf]
        %v298 = vld [vmem:[%s217 + $0x8c] sm:$0xf]
        %v299 = vld [vmem:[%s217 + $0x90] sm:$0xf]
        %v300 = vld [vmem:[%s217 + $0x94] sm:$0xf]
        %v301 = vld [vmem:[%s217 + $0x98] sm:$0xf]
        %v302 = vld [vmem:[%s217 + $0x9c] sm:$0xf]
        %v303 = vld [vmem:[%s217 + $0xa0] sm:$0xf]
        %v304 = vld [vmem:[%s217 + $0xa4] sm:$0xf]
        %v305 = vld [vmem:[%s217 + $0xa8] sm:$0xf]
        %v306 = vld [vmem:[%s217 + $0xac] sm:$0xf]
        %v307 = vld [vmem:[%s217 + $0xb0] sm:$0xf]
        %v308 = vld [vmem:[%s217 + $0xb4] sm:$0xf]
        %v309 = vld [vmem:[%s217 + $0xb8] sm:$0xf]
        %v310 = vld [vmem:[%s217 + $0xbc] sm:$0xf]
        %v311 = vld [vmem:[%s217 + $0xc0] sm:$0xf]
        %v312 = vld [vmem:[%s217 + $0xc4] sm:$0xf]
        %v313 = vld [vmem:[%s217 + $0xc8] sm:$0xf]
        %v314 = vld [vmem:[%s217 + $0xcc] sm:$0xf]
        %v315 = vld [vmem:[%s217 + $0xd0] sm:$0xf]
        %v316 = vld [vmem:[%s217 + $0xd4] sm:$0xf]
        %v317 = vld [vmem:[%s217 + $0xd8] sm:$0xf]
        %v318 = vld [vmem:[%s217 + $0xdc] sm:$0xf]
        %v319 = vld [vmem:[%s217 + $0xe0] sm:$0xf]
        %v320 = vld [vmem:[%s217 + $0xe4] sm:$0xf]
        %v321 = vld [vmem:[%s217 + $0xe8] sm:$0xf]
        %v322 = vld [vmem:[%s217 + $0xec] sm:$0xf]
        %v323 = vld [vmem:[%s217 + $0xf0] sm:$0xf]
        %v324 = vld [vmem:[%s217 + $0xf4] sm:$0xf]
        %v325 = vld [vmem:[%s217 + $0xf8] sm:$0xf]
        %v326 = vld [vmem:[%s217 + $0xfc] sm:$0xf]
        %v329 = vunpack.c.l.s4 1966171168
        %v330 = vunpack.c.0.s8 %v329
        %v331 = vlaneseq
        %v332 = vshrl.u32 %v331, 7
        %v333 = vsub.s32 %v330, %v332
        %v334 = vrot.slane %v262, %v333
        %v335 = vcombine.high %v334, %v334
        %v337 = vunpack.c.l.s4 1966171168
        %v338 = vunpack.c.0.s8 %v337
        %v339 = vlaneseq
        %v340 = vshrl.u32 %v339, 7
        %v341 = vsub.s32 %v338, %v340
        %v342 = vrot.slane %v334, %v341
        %v344 = vunpack.c.l.s4 1966171168
        %v345 = vunpack.c.0.s8 %v344
        %v346 = vlaneseq
        %v347 = vshrl.u32 %v346, 7
        %v348 = vsub.s32 %v345, %v347
        %v349 = vrot.slane %v335, %v348
        %v350 = vcombine.high %v342, %v342
        %v351 = vcombine.high %v349, %v349
        %v420 = vunpack.c.l.b16 %v263
        %v421 = vunpack.c.l.b16 %v264
        %v422 = vunpack.c.l.b16 %v265
        %v423 = vunpack.c.l.b16 %v266
        %v424 = vunpack.c.l.b16 %v267
        %v425 = vunpack.c.l.b16 %v268
        %v426 = vunpack.c.l.b16 %v269
        %v427 = vunpack.c.l.b16 %v270
        %v428 = vunpack.c.l.b16 %v271
        %v429 = vunpack.c.l.b16 %v272
        %v430 = vunpack.c.l.b16 %v273
        %v431 = vunpack.c.l.b16 %v274
        %v432 = vunpack.c.l.b16 %v275
        %v433 = vunpack.c.l.b16 %v276
        %v434 = vunpack.c.l.b16 %v277
        %v435 = vunpack.c.l.b16 %v278
        %v436 = vunpack.c.l.b16 %v279
        %v437 = vunpack.c.l.b16 %v280
        %v438 = vunpack.c.l.b16 %v281
        %v439 = vunpack.c.l.b16 %v282
        %v440 = vunpack.c.l.b16 %v283
        %v441 = vunpack.c.l.b16 %v284
        %v442 = vunpack.c.l.b16 %v285
        %v443 = vunpack.c.l.b16 %v286
        %v444 = vunpack.c.l.b16 %v287
        %v445 = vunpack.c.l.b16 %v288
        %v446 = vunpack.c.l.b16 %v289
        %v447 = vunpack.c.l.b16 %v290
        %v448 = vunpack.c.l.b16 %v291
        %v449 = vunpack.c.l.b16 %v292
        %v450 = vunpack.c.l.b16 %v293
        %v451 = vunpack.c.l.b16 %v294
        %v452 = vunpack.c.l.b16 %v295
        %v453 = vunpack.c.l.b16 %v296
        %v454 = vunpack.c.l.b16 %v297
        %v455 = vunpack.c.l.b16 %v298
        %v456 = vunpack.c.l.b16 %v299
        %v457 = vunpack.c.l.b16 %v300
        %v458 = vunpack.c.l.b16 %v301
        %v459 = vunpack.c.l.b16 %v302
        %v460 = vunpack.c.l.b16 %v303
        %v461 = vunpack.c.l.b16 %v304
        %v462 = vunpack.c.l.b16 %v305
        %v463 = vunpack.c.l.b16 %v306
        %v464 = vunpack.c.l.b16 %v307
        %v465 = vunpack.c.l.b16 %v308
        %v466 = vunpack.c.l.b16 %v309
        %v467 = vunpack.c.l.b16 %v310
        %v468 = vunpack.c.l.b16 %v311
        %v469 = vunpack.c.l.b16 %v312
        %v470 = vunpack.c.l.b16 %v313
        %v471 = vunpack.c.l.b16 %v314
        %v472 = vunpack.c.l.b16 %v315
        %v473 = vunpack.c.l.b16 %v316
        %v474 = vunpack.c.l.b16 %v317
        %v475 = vunpack.c.l.b16 %v318
        %v476 = vunpack.c.l.b16 %v319
        %v477 = vunpack.c.l.b16 %v320
        %v478 = vunpack.c.l.b16 %v321
        %v479 = vunpack.c.l.b16 %v322
        %v480 = vunpack.c.l.b16 %v323
        %v481 = vunpack.c.l.b16 %v324
        %v482 = vunpack.c.l.b16 %v325
        %v483 = vunpack.c.l.b16 %v326
        %v484 = vpack.c.b16 %v421, %v420
        %v485 = vpack.c.b16 %v423, %v422
        %v486 = vpack.c.b16 %v425, %v424
        %v487 = vpack.c.b16 %v427, %v426
        %v488 = vpack.c.b16 %v429, %v428
        %v489 = vpack.c.b16 %v431, %v430
        %v490 = vpack.c.b16 %v433, %v432
        %v491 = vpack.c.b16 %v435, %v434
        %v492 = vpack.c.b16 %v437, %v436
        %v493 = vpack.c.b16 %v439, %v438
        %v494 = vpack.c.b16 %v441, %v440
        %v495 = vpack.c.b16 %v443, %v442
        %v496 = vpack.c.b16 %v445, %v444
        %v497 = vpack.c.b16 %v447, %v446
        %v498 = vpack.c.b16 %v449, %v448
        %v499 = vpack.c.b16 %v451, %v450
        %v500 = vpack.c.b16 %v453, %v452
        %v501 = vpack.c.b16 %v455, %v454
        %v502 = vpack.c.b16 %v457, %v456
        %v503 = vpack.c.b16 %v459, %v458
        %v504 = vpack.c.b16 %v461, %v460
        %v505 = vpack.c.b16 %v463, %v462
        %v506 = vpack.c.b16 %v465, %v464
        %v507 = vpack.c.b16 %v467, %v466
        %v508 = vpack.c.b16 %v469, %v468
        %v509 = vpack.c.b16 %v471, %v470
        %v510 = vpack.c.b16 %v473, %v472
        %v511 = vpack.c.b16 %v475, %v474
        %v512 = vpack.c.b16 %v477, %v476
        %v513 = vpack.c.b16 %v479, %v478
        %v514 = vpack.c.b16 %v481, %v480
        %v515 = vpack.c.b16 %v483, %v482
        %548 = vmatprep.subr.bf16.mxu0 0
        %549 = vmatpush1.bf16.msra.mxu0 %v484
        %550 = vmatprep.subr.bf16.mxu0 0
        %551 = vmatpush1.bf16.msra.mxu0 %v485
        %552 = vmatprep.subr.bf16.mxu0 0
        %553 = vmatpush1.bf16.msra.mxu0 %v486
        %554 = vmatprep.subr.bf16.mxu0 0
        %555 = vmatpush1.bf16.msra.mxu0 %v487
        %556 = vmatprep.subr.bf16.mxu0 0
        %557 = vmatpush1.bf16.msra.mxu0 %v488
        %558 = vmatprep.subr.bf16.mxu0 0
        %559 = vmatpush1.bf16.msra.mxu0 %v489
        %560 = vmatprep.subr.bf16.mxu0 0
        %561 = vmatpush1.bf16.msra.mxu0 %v490
        %562 = vmatprep.subr.bf16.mxu0 0
        %563 = vmatpush1.bf16.msra.mxu0 %v491
        %564 = vmatprep.subr.bf16.mxu0 0
        %565 = vmatpush1.bf16.msra.mxu0 %v492
        %566 = vmatprep.subr.bf16.mxu0 0
        %567 = vmatpush1.bf16.msra.mxu0 %v493
        %568 = vmatprep.subr.bf16.mxu0 0
        %569 = vmatpush1.bf16.msra.mxu0 %v494
        %570 = vmatprep.subr.bf16.mxu0 0
        %571 = vmatpush1.bf16.msra.mxu0 %v495
        %572 = vmatprep.subr.bf16.mxu0 0
        %573 = vmatpush1.bf16.msra.mxu0 %v496
        %574 = vmatprep.subr.bf16.mxu0 0
        %575 = vmatpush1.bf16.msra.mxu0 %v497
        %576 = vmatprep.subr.bf16.mxu0 0
        %577 = vmatpush1.bf16.msra.mxu0 %v498
        %578 = vmatprep.subr.bf16.mxu0 0
        %579 = vmatpush1.bf16.msra.mxu0 %v499
        %580 = vmatprep.mubr.bf16.mxu0 %v349
        %581 = vmatmul.mubr.bf16.gmra.mrb[0].mxu0 %v342
        %v582 = vpop.f32.mrb[0].mxu0
        %v583 = vadd.f32 0.0, %v582
        %v584 = vpop.f32.mrb[0].mxu0
        %v585 = vpop.f32.mrb[0].mxu0
        %v586 = vpop.f32.mrb[0].mxu0
        %587 = vdwg.mxu0
        %588 = vmatprep.subr.bf16.mxu0 0
        %589 = vmatpush1.bf16.msra.mxu0 %v500
        %590 = vmatprep.subr.bf16.mxu0 0
        %591 = vmatpush1.bf16.msra.mxu0 %v501
        %592 = vmatprep.subr.bf16.mxu0 0
        %593 = vmatpush1.bf16.msra.mxu0 %v502
        %594 = vmatprep.subr.bf16.mxu0 0
        %595 = vmatpush1.bf16.msra.mxu0 %v503
        %596 = vmatprep.subr.bf16.mxu0 0
        %597 = vmatpush1.bf16.msra.mxu0 %v504
        %598 = vmatprep.subr.bf16.mxu0 0
        %599 = vmatpush1.bf16.msra.mxu0 %v505
        %600 = vmatprep.subr.bf16.mxu0 0
        %601 = vmatpush1.bf16.msra.mxu0 %v506
        %602 = vmatprep.subr.bf16.mxu0 0
        %603 = vmatpush1.bf16.msra.mxu0 %v507
        %604 = vmatprep.subr.bf16.mxu0 0
        %605 = vmatpush1.bf16.msra.mxu0 %v508
        %606 = vmatprep.subr.bf16.mxu0 0
        %607 = vmatpush1.bf16.msra.mxu0 %v509
        %608 = vmatprep.subr.bf16.mxu0 0
        %609 = vmatpush1.bf16.msra.mxu0 %v510
        %610 = vmatprep.subr.bf16.mxu0 0
        %611 = vmatpush1.bf16.msra.mxu0 %v511
        %612 = vmatprep.subr.bf16.mxu0 0
        %613 = vmatpush1.bf16.msra.mxu0 %v512
        %614 = vmatprep.subr.bf16.mxu0 0
        %615 = vmatpush1.bf16.msra.mxu0 %v513
        %616 = vmatprep.subr.bf16.mxu0 0
        %617 = vmatpush1.bf16.msra.mxu0 %v514
        %618 = vmatprep.subr.bf16.mxu0 0
        %619 = vmatpush1.bf16.msra.mxu0 %v515
        %620 = vmatprep.mubr.bf16.mxu0 %v351
        %621 = vmatmul.mubr.bf16.gmra.mrb[0].mxu0 %v350
        %v622 = vpop.f32.mrb[0].mxu0
        %v623 = vadd.f32 %v583, %v622
        %v624 = vpop.f32.mrb[0].mxu0
        %v625 = vpop.f32.mrb[0].mxu0
        %v626 = vpop.f32.mrb[0].mxu0
        %627 = vdwg.mxu0
        %v628 = vadd.f32 %v261, %v623
        %629 = vst [vmem:[#allocation2] sm:$0x3] %v628
        %p630 = scmp.eq.s32.totalorder %s24, 1
        // Predicated region
        $region45: #{tpu_custom_call.1} parent=35 // pred_check
          %p631 = pneg %p630
        $region46: #{tpu_custom_call.1} parent=35 // pred_check_branch
          %633 = sbr.rel (%p631) target = $region48
        $region47: #{tpu_custom_call.1} parent=35 // pred_region
          %v634 = vld [vmem:[#allocation2] sm:$0x3]
          %v635 = vld [vmem:[%s2] sm:$0x1]
          %v637 = vlaneseq
          %v638 = vshrl.u32 %v637, 7
          %v639 = vsub.s32 0, %v638
          %v640 = vrot.slane %v635, %v639
          %v642 = vadd.f32 %v634, %v640
          %v643 = vlaneseq
          %v644 = vand.u32 %v643, 127
          %vm645 = vcmp.lt.s32.totalorder %v644, 10
          %v646 = vsel %vm645, %v642, -inf
          %vm647 = vcmask 1041408
          %v648 = vsel %vm647, %v646, -inf
          %649 = vmax.xlane.f32.xlu0 %v648
          %v650 = vpop.xlane.xlu0 %649
          %vm651 = vcmp.eq.f32.partialorder %v646, %v650
          %v652 = vsel %vm651, %v644, 128
          %v653 = vsel %vm647, %v652, 2147483647
          %v654 = vand.u32 %v653, 65535
          %v655 = vshra.s32 %v653, 16
          %v656 = vcvt.s32.f32 %v654
          %v657 = vcvt.s32.f32 %v655
          %658 = vmin.xlane.f32.xlu0 %v657
          %v659 = vpop.xlane.xlu0 %658
          %vm660 = vcmp.eq.f32.partialorder %v657, %v659
          %v661 = vsel %vm660, %v656, inf
          %662 = vmin.xlane.f32.xlu0 %v661
          %v663 = vpop.xlane.xlu0 %662
          %v664 = vcvt.f32.s32 %v663
          %v665 = vcvt.f32.s32 %v659
          %v666 = vshll.u32 %v665, 16
          %v667 = vadd.s32 %v666, %v664
          %vm668 = vcmp.ge.s32.totalorder %v644, 10
          %v669 = vmul.f32 %v642, %v642
          %v670 = vsel %vm668, %v669, 0.0
          %v671 = vsel %vm647, %v670, 0.0
          %672 = vadd.xlane.f32.xlu0 %v671
          %v673 = vpop.xlane.xlu0 %672
          %v674 = vadd.f32 %v673, 1e-12
          %v675 = vrsqrt.pop %v674
          %v676 = vmul.f32 %v642, %v675
          %v677 = vld [vmem:[%s3] sm:$0xff]
          %v678 = vld [vmem:[%s3 + $0x8] sm:$0xff]
          %v679 = vld [vmem:[%s3 + $0x10] sm:$0xff]
          %v680 = vld [vmem:[%s3 + $0x18] sm:$0xff]
          %v681 = vld [vmem:[%s3 + $0x20] sm:$0xff]
          %v682 = vld [vmem:[%s3 + $0x28] sm:$0xff]
          %v683 = vld [vmem:[%s3 + $0x30] sm:$0xff]
          %v684 = vld [vmem:[%s3 + $0x38] sm:$0xff]
          %v685 = vld [vmem:[%s3 + $0x40] sm:$0xff]
          %v686 = vld [vmem:[%s3 + $0x48] sm:$0xff]
          %v687 = vld [vmem:[%s3 + $0x50] sm:$0xff]
          %v688 = vld [vmem:[%s3 + $0x58] sm:$0xff]
          %v689 = vld [vmem:[%s3 + $0x60] sm:$0xff]
          %v690 = vld [vmem:[%s3 + $0x68] sm:$0xff]
          %v691 = vld [vmem:[%s3 + $0x70] sm:$0xff]
          %v692 = vld [vmem:[%s3 + $0x78] sm:$0xff]
          %693 = vmatprep.subr.mxu0 0.0
          %694 = vmatpush1.msra.mxu0 %v677
          %695 = vmatprep.subr.mxu0 0.0
          %696 = vmatpush1.msra.mxu0 %v678
          %697 = vmatprep.subr.mxu0 0.0
          %698 = vmatpush1.msra.mxu0 %v679
          %699 = vmatprep.subr.mxu0 0.0
          %700 = vmatpush1.msra.mxu0 %v680
          %701 = vmatprep.subr.mxu0 0.0
          %702 = vmatpush1.msra.mxu0 %v681
          %703 = vmatprep.subr.mxu0 0.0
          %704 = vmatpush1.msra.mxu0 %v682
          %705 = vmatprep.subr.mxu0 0.0
          %706 = vmatpush1.msra.mxu0 %v683
          %707 = vmatprep.subr.mxu0 0.0
          %708 = vmatpush1.msra.mxu0 %v684
          %709 = vmatprep.subr.mxu0 0.0
          %710 = vmatpush1.msra.mxu0 %v685
          %711 = vmatprep.subr.mxu0 0.0
          %712 = vmatpush1.msra.mxu0 %v686
          %713 = vmatprep.subr.mxu0 0.0
          %714 = vmatpush1.msra.mxu0 %v687
          %715 = vmatprep.subr.mxu0 0.0
          %716 = vmatpush1.msra.mxu0 %v688
          %717 = vmatprep.subr.mxu0 0.0
          %718 = vmatpush1.msra.mxu0 %v689
          %719 = vmatprep.subr.mxu0 0.0
          %720 = vmatpush1.msra.mxu0 %v690
          %721 = vmatprep.subr.mxu0 0.0
          %722 = vmatpush1.msra.mxu0 %v691
          %723 = vmatprep.subr.mxu0 0.0
          %724 = vmatpush1.msra.mxu0 %v692
          %725 = vmatprep.subr.mxu0 0.0
          %726 = vmatpush1.msra.mxu0 0.0
          %727 = vmatprep.subr.mxu0 0.0
          %728 = vmatpush1.msra.mxu0 0.0
          %729 = vmatprep.subr.mxu0 0.0
          %730 = vmatpush1.msra.mxu0 0.0
          %731 = vmatprep.subr.mxu0 0.0
          %732 = vmatpush1.msra.mxu0 0.0
          %733 = vmatprep.subr.mxu0 0.0
          %734 = vmatpush1.msra.mxu0 0.0
          %735 = vmatprep.subr.mxu0 0.0
          %736 = vmatpush1.msra.mxu0 0.0
          %737 = vmatprep.subr.mxu0 0.0
          %738 = vmatpush1.msra.mxu0 0.0
          %739 = vmatprep.subr.mxu0 0.0
          %740 = vmatpush1.msra.mxu0 0.0
          %741 = vmatprep.subr.mxu0 0.0
          %742 = vmatpush1.msra.mxu0 0.0
          %743 = vmatprep.subr.mxu0 0.0
          %744 = vmatpush1.msra.mxu0 0.0
          %745 = vmatprep.subr.mxu0 0.0
          %746 = vmatpush1.msra.mxu0 0.0
          %747 = vmatprep.subr.mxu0 0.0
          %748 = vmatpush1.msra.mxu0 0.0
          %749 = vmatprep.subr.mxu0 0.0
          %750 = vmatpush1.msra.mxu0 0.0
          %751 = vmatprep.subr.mxu0 0.0
          %752 = vmatpush1.msra.mxu0 0.0
          %753 = vmatprep.subr.mxu0 0.0
          %754 = vmatpush1.msra.mxu0 0.0
          %755 = vmatprep.subr.mxu0 0.0
          %756 = vmatpush1.msra.mxu0 0.0
          %757 = vmatprep.mubr.f32.mxu0 0.0
          %758 = vmatmul.mubr.f32.gmra.mrb[0].mxu0 %v676
          %v759 = vpop.f32.mrb[0].mxu0
          %v760 = vadd.f32 0.0, %v759
          %v761 = vpop.f32.mrb[0].mxu0
          %762 = vdwg.mxu0
          %vm763 = vcmp.eq.s32.totalorder %v644, %v667
          %v764 = vsel %vm763, %v760, 0.0
          %vm765 = vcmask 74752
          %v766 = vsel %vm765, %v764, 0.0
          %767 = vadd.xlane.f32.xlu0 %v766
          %v768 = vpop.xlane.xlu0 %767
          %v769 = vsel %vm765, %v760, -inf
          %770 = vmax.xlane.f32.xlu0 %v769
          %v771 = vpop.xlane.xlu0 %770
          %v772 = vsub.f32 %v771, %v768
          %v773 = vand.u32 2147483647, %v772
          %v774 = vadd.f32 %v650, %v773
          %v775 = vsub.f32 %v774, 0.001
          %v776 = vsel %vm645, %v642, 0.0
          %vm777 = vcmp.eq.s32.totalorder %v644, 10
          %v778 = vsel %vm777, %v775, %v776
          %779 = vst [vmem:[#allocation6] sm:$0x3] %v778
        $region48: #{tpu_custom_call.1} parent=35 // pred_fallthru
          _
        // Predicated region
        $region49: #{tpu_custom_call.1} parent=35 // pred_check
          %p780 = pneg %p145
        $region50: #{tpu_custom_call.1} parent=35 // pred_check_branch
          %782 = sbr.rel (%p780) target = $region52
        $region51: #{tpu_custom_call.1} parent=35 // pred_region
          %s784 = ssub.s32 32, 32
          %785 = vsyncadd [#allocation5], %s784
          %s786 = smul.addr %s23, 32
          %s787 = scalar_lea.hbm %s4, %s786
          %s789 = sshll.u32 [#allocation6], 4
          %s790 = int_to_ptr.vmem [resolvable:$true] %s789
          %792 = dma.vmem_to_hbm [thread:$0]  %s790, 32, %s787, [#allocation5]
        $region52: #{tpu_custom_call.1} parent=35 // pred_fallthru
          _
        // Predicated region
        $region53: #{tpu_custom_call.1} parent=35 // pred_check
          %p793 = pneg %p145
        $region54: #{tpu_custom_call.1} parent=35 // pred_check_branch
          %795 = sbr.rel (%p793) target = $region56
        $region55: #{tpu_custom_call.1} parent=35 // pred_region
          %796 = dma.done [#allocation5], 32
        $region56: #{tpu_custom_call.1} parent=35 // pred_fallthru
          _
      $region36: #{tpu_custom_call.1} parent=5 // pred_fallthru
        _
      %p797 = scmp.le.s32.totalorder 2, %s14
      // Predicated region
      $region57: #{tpu_custom_call.1} parent=5 // pred_check
        %p798 = pneg %p797
      $region58: #{tpu_custom_call.1} parent=5 // pred_check_branch
        %800 = sbr.rel (%p798) target = $region60
      $region59: #{tpu_custom_call.1} parent=5 // pred_region
        %s801 = ssub.s32 %s14, 2
      $region60: #{tpu_custom_call.1} parent=5 // pred_fallthru
        _
    $region6: #{tpu_custom_call.1} parent=1 // loop_footer
      %s18 = sadd.s32 1, %s14
    $region7: #{tpu_custom_call.1} parent=1 // loop_footer_branch
      %13 = sbr.rel target = $region3
    $region8: #{tpu_custom_call.1} parent=1 // loop_exit
      _
    %802 = vsyncpa [#allocation4], 1
    %s803 = scalar_lea.sflag [#allocation4], 1
    %804 = vsyncpa %s803, 1
    %805 = vsyncpa [#allocation5], 1
    %s806 = scalar_lea.sflag [#allocation5], 1
    %807 = vsyncpa %s806, 1

</llo_original>
